<compile_context>
chip_gen: v7x
topology: tpu7x:2x2x1
jax: 0.10.0
libtpu: 0.0.40
codegen_flags: <defaults>
</compile_context>

<pallas_src>
import jax
import jax.numpy as jnp
from jax.experimental import pallas as pl
from jax.experimental.pallas import tpu as pltpu

LANES = 128
SUBLANES = 8
MAX_TILE_ROWS = 1024                      # measured HBM-roofline knee (512-1024 rows)
VMEM_WORKSET_BUDGET = 12 * 1024 * 1024    # stays under v5e's 16 MiB default scoped VMEM


def _make_update_x_kernel(num_modes):
    """Build the kernel for K = num_modes separate Gtr inputs."""
    inv_k = 1.0 / float(num_modes)

    def kernel(*refs):
        # refs = (g_0, ..., g_{K-1}, x, omega, out), each a (tm, 128) VMEM tile.
        g_refs = refs[:num_modes]
        x_ref, omega_ref, out_ref = refs[num_modes:]

        # Ui2U: explicit sum of the K estimates, then one constant multiply (1/K).
        g_sum = g_refs[0][...]
        for g_ref in g_refs[1:]:
            g_sum = g_sum + g_ref[...]
        g_cat = g_sum * inv_k

        x = x_ref[...]
        omega = omega_ref[...]
        omega_c = 1.0 - omega              # Omega_C
        m_omega = x * omega                # M_Omega
        # Keep the literal double multiply from the spec (X * Omega * Omega);
        # the kernel is HBM-bound so the extra VALU op is free filler.
        out_ref[...] = g_cat * omega_c + m_omega * omega

    return kernel


def _flatten_pad(a, rows_padded):
    """Row-major flatten to f32, zero-pad, reshape to (rows_padded, 128)."""
    flat = a.reshape(-1).astype(jnp.float32)
    pad = rows_padded * LANES - flat.shape[0]
    if pad:
        flat = jnp.pad(flat, (0, pad))
    return flat.reshape(rows_padded, LANES)


def _pick_tile(rows, num_inputs, tile_rows):
    """Choose (tm, rows_padded, grid_steps) with minimal row padding."""
    if tile_rows is not None:
        tm = max(SUBLANES, (min(int(tile_rows), MAX_TILE_ROWS) // SUBLANES) * SUBLANES)
        n_steps = -(-rows // tm)
        return tm, n_steps * tm, n_steps

    # Cap from VMEM budget: double-buffered (K Gtr + X + Omega + out) tiles.
    bytes_per_row = num_inputs * LANES * 4
    budget_rows = VMEM_WORKSET_BUDGET // (2 * bytes_per_row)
    cap = min(MAX_TILE_ROWS, max(SUBLANES, budget_rows))
    cap = max(SUBLANES, (cap // SUBLANES) * SUBLANES)

    # Balance the tile over the steps so padding waste is < SUBLANES rows/step.
    n_steps = -(-rows // cap)
    tm_exact = -(-rows // n_steps)
    tm = -(-tm_exact // SUBLANES) * SUBLANES
    return tm, n_steps * tm, n_steps


def updating_x_layer(X, Omega, Gtr_list, data_size, tile_rows=None):
    """Pallas version of Updating_X_Layer.forward.

    X, Omega : arrays of shape `data_size`
    Gtr_list : list of K arrays, each with prod(data_size) elements
    tile_rows: optional override of the per-step row tile (multiple of 8)
    """
    total = 1
    for d in data_size:
        total *= d
    K = len(Gtr_list)
    assert K >= 1

    rows = -(-total // LANES)              # ceil-div: rows of 128 lanes
    tm, rows_padded, n_steps = _pick_tile(rows, K + 3, tile_rows)
    grid = (n_steps,)

    # ---- prepare lane-dense operands (no jnp.stack of the K estimates) ----
    g2 = [_flatten_pad(g, rows_padded) for g in Gtr_list]
    x2 = _flatten_pad(X, rows_padded)
    om2 = _flatten_pad(Omega, rows_padded)

    tile_spec = pl.BlockSpec((tm, LANES), lambda i: (i, 0))

    out = pl.pallas_call(
        _make_update_x_kernel(K),
        out_shape=jax.ShapeDtypeStruct((rows_padded, LANES), jnp.float32),
        grid_spec=pltpu.PrefetchScalarGridSpec(
            num_scalar_prefetch=0,
            grid=grid,
            in_specs=[tile_spec] * (K + 2),   # K Gtr tiles, X tile, Omega tile
            out_specs=tile_spec,
        ),
        compiler_params=pltpu.CompilerParams(
            dimension_semantics=("parallel",)),
    )(*g2, x2, om2)

    return out.reshape(-1)[:total].reshape(data_size)


def _reference(X, Omega, Gtr_list, data_size):
    g_cat = jnp.mean(jnp.stack([g.reshape(-1) for g in Gtr_list], 0), 0)
    g_cat = g_cat.reshape(data_size)
    omega_c = 1.0 - Omega
    m_omega = X * Omega
    return g_cat * omega_c + m_omega * Omega


if __name__ == "__main__":
    def run_case(data_size, K, key, tile_rows=None):
        k_x, k_o, k_g = jax.random.split(key, 3)
        X = jax.random.normal(k_x, data_size, dtype=jnp.float32)
        # Omega: observation mask (binary here, as in tensor completion)
        Omega = (jax.random.uniform(k_o, data_size) > 0.5).astype(jnp.float32)
        g_keys = jax.random.split(k_g, K)
        Gtr = [jax.random.normal(gk, data_size, dtype=jnp.float32) for gk in g_keys]

        out = updating_x_layer(X, Omega, Gtr, data_size, tile_rows=tile_rows)
        out = jax.block_until_ready(out)

        ref = _reference(X, Omega, Gtr, data_size)
        assert out.shape == tuple(data_size)
        assert jnp.allclose(out, ref, atol=1e-5, rtol=1e-5)

    key = jax.random.PRNGKey(0)
    k1, k2, k3 = jax.random.split(key, 3)

    # Tiny case (matches the original layer's Data_Size usage): single grid step.
    run_case((4, 16, 16), K=3, key=k1)
    # Multi-step grid + explicit row-tile override (240 rows -> 4 tiles of 64).
    run_case((6, 40, 128), K=3, key=k2, tile_rows=64)
    # Multi-step grid with auto (balanced) tile selection and non-multiple-of-128 total.
    run_case((5, 33, 100), K=4, key=k3)

    print("KERNEL_OK")
</pallas_src>

<mosaic_0001>
module attributes {stable_mosaic.version = 11 : i64} {
  func.func @kernel(%arg0: i32, %arg1: memref<8x128xf32, #tpu.memory_space<vmem>>, %arg2: memref<8x128xf32, #tpu.memory_space<vmem>>, %arg3: memref<8x128xf32, #tpu.memory_space<vmem>>, %arg4: memref<8x128xf32, #tpu.memory_space<vmem>>, %arg5: memref<8x128xf32, #tpu.memory_space<vmem>>, %arg6: memref<8x128xf32, #tpu.memory_space<vmem>>) attributes {dimension_semantics = [#tpu.dimension_semantics<parallel>], iteration_bounds = array<i64: 1>, scalar_prefetch = 0 : i64, scratch_operands = 0 : i64, tpu.core_type = #tpu.core_type<tc>, window_params = [{transform_indices = @transform_0, window_bounds = array<i64: 8, 128>}, {transform_indices = @transform_1, window_bounds = array<i64: 8, 128>}, {transform_indices = @transform_2, window_bounds = array<i64: 8, 128>}, {transform_indices = @transform_3, window_bounds = array<i64: 8, 128>}, {transform_indices = @transform_4, window_bounds = array<i64: 8, 128>}, {transform_indices = @transform_5, window_bounds = array<i64: 8, 128>}]} {
    %c0 = arith.constant 0 : index
    %c0_0 = arith.constant 0 : index
    %0 = vector.load %arg1[%c0, %c0_0] : memref<8x128xf32, #tpu.memory_space<vmem>>, vector<8x128xf32>
    %c0_1 = arith.constant 0 : index
    %c0_2 = arith.constant 0 : index
    %1 = vector.load %arg2[%c0_1, %c0_2] : memref<8x128xf32, #tpu.memory_space<vmem>>, vector<8x128xf32>
    %2 = arith.addf %0, %1 : vector<8x128xf32>
    %c0_3 = arith.constant 0 : index
    %c0_4 = arith.constant 0 : index
    %3 = vector.load %arg3[%c0_3, %c0_4] : memref<8x128xf32, #tpu.memory_space<vmem>>, vector<8x128xf32>
    %4 = arith.addf %2, %3 : vector<8x128xf32>
    %cst = arith.constant 0.333333343 : f32
    %5 = vector.broadcast %cst : f32 to vector<8x128xf32>
    %6 = arith.mulf %4, %5 : vector<8x128xf32>
    %c0_5 = arith.constant 0 : index
    %c0_6 = arith.constant 0 : index
    %7 = vector.load %arg4[%c0_5, %c0_6] : memref<8x128xf32, #tpu.memory_space<vmem>>, vector<8x128xf32>
    %c0_7 = arith.constant 0 : index
    %c0_8 = arith.constant 0 : index
    %8 = vector.load %arg5[%c0_7, %c0_8] : memref<8x128xf32, #tpu.memory_space<vmem>>, vector<8x128xf32>
    %cst_9 = arith.constant 1.000000e+00 : f32
    %9 = vector.broadcast %cst_9 : f32 to vector<8x128xf32>
    %10 = arith.subf %9, %8 : vector<8x128xf32>
    %11 = arith.mulf %7, %8 : vector<8x128xf32>
    %12 = arith.mulf %6, %10 : vector<8x128xf32>
    %13 = arith.mulf %11, %8 : vector<8x128xf32>
    %14 = arith.addf %12, %13 : vector<8x128xf32>
    %c0_10 = arith.constant 0 : index
    %c0_11 = arith.constant 0 : index
    %15 = vector.load %arg6[%c0_10, %c0_11] : memref<8x128xf32, #tpu.memory_space<vmem>>, vector<8x128xf32>
    tpu.vector_store %arg6[%c0_10, %c0_11], %14 {strides = array<i32>} : memref<8x128xf32, #tpu.memory_space<vmem>>, vector<8x128xf32>,
    return
  }
  func.func @transform_0(%arg0: i32) -> (i32, i32) {
    %c0_i32 = arith.constant 0 : i32
    %c0_i32_0 = arith.constant 0 : i32
    return %arg0, %c0_i32 : i32, i32
  }
  func.func @transform_1(%arg0: i32) -> (i32, i32) {
    %c0_i32 = arith.constant 0 : i32
    %c0_i32_0 = arith.constant 0 : i32
    return %arg0, %c0_i32 : i32, i32
  }
  func.func @transform_2(%arg0: i32) -> (i32, i32) {
    %c0_i32 = arith.constant 0 : i32
    %c0_i32_0 = arith.constant 0 : i32
    return %arg0, %c0_i32 : i32, i32
  }
  func.func @transform_3(%arg0: i32) -> (i32, i32) {
    %c0_i32 = arith.constant 0 : i32
    %c0_i32_0 = arith.constant 0 : i32
    return %arg0, %c0_i32 : i32, i32
  }
  func.func @transform_4(%arg0: i32) -> (i32, i32) {
    %c0_i32 = arith.constant 0 : i32
    %c0_i32_0 = arith.constant 0 : i32
    return %arg0, %c0_i32 : i32, i32
  }
  func.func @transform_5(%arg0: i32) -> (i32, i32) {
    %c0_i32 = arith.constant 0 : i32
    %c0_i32_0 = arith.constant 0 : i32
    return %arg0, %c0_i32 : i32, i32
  }
}

</mosaic_0001>

<llo_original>
// kernel: tpu_custom_call.1
$region0: #{tpu_custom_call.1}
  #allocation0 [shape = 'u32[]', space=smem, size = 0x4, offset = 0x4, fixed_abs, tag = 'smem constant byte address 0x4 - core index']
  #allocation1 [shape = 'u32[144,128]{1,0:T(1,128)}', space=vmem, size = 0x12000, scoped, tag = 'internal scratch']
  %s0 = inlined_call_operand.hbm [shape: f32[8,128], index: 0, kind: input, shape index: {}]
  %s1 = inlined_call_operand.hbm [shape: f32[8,128], index: 1, kind: input, shape index: {}]
  %s2 = inlined_call_operand.hbm [shape: f32[8,128], index: 2, kind: input, shape index: {}]
  %s3 = inlined_call_operand.vmem [shape: f32[8,128], index: 3, kind: input, shape index: {}]
  %s4 = inlined_call_operand.hbm [shape: f32[8,128], index: 4, kind: input, shape index: {}]
  %s5 = inlined_call_operand.hbm [shape: f32[8,128], index: 5, kind: output, shape index: {}]
  %s6 = sld [smem:[#allocation0]]
  $region46: #{tpu_custom_call.1} parent=0
    _
  %s8 = ssub.s32 1, %s6
  %s9 = scalar_select 0, %s8, %s6
  $region1: #{tpu_custom_call.1} parent=0
    #allocation2 [shape = 'u8[4096]{0}', space=vmem, size = 0x1000, scoped, tag = 'input window, operand 0, single buffered']
    #allocation3 [shape = 's32[1]{0}', space=sflag, size = 0x4, scoped, tag = 'scoped memory for tpu_custom_call.1']
    #allocation4 [shape = 's32[1]{0}', space=sflag, size = 0x4, scoped, tag = 'scoped memory for tpu_custom_call.1']
    #allocation5 [shape = 'u8[4096]{0}', space=vmem, size = 0x1000, scoped, tag = 'input window, operand 1, single buffered']
    #allocation6 [shape = 's32[1]{0}', space=sflag, size = 0x4, scoped, tag = 'scoped memory for tpu_custom_call.1']
    #allocation7 [shape = 'u8[4096]{0}', space=vmem, size = 0x1000, scoped, tag = 'input window, operand 2, single buffered']
    #allocation8 [shape = 'u8[4096]{0}', space=vmem, size = 0x1000, scoped, tag = 'input window, operand 4, single buffered']
    #allocation9 [shape = 's32[1]{0}', space=sflag, size = 0x4, scoped, tag = 'scoped memory for tpu_custom_call.1']
    #allocation10 [shape = 'u8[4096]{0}', space=vmem, size = 0x1000, scoped, tag = 'output window, operand 0, single buffered']
    %10 = vsyncpa [#allocation3], 0
    %11 = vsyncpa [#allocation6], 0
    %12 = vsyncpa [#allocation9], 0
    %13 = vsyncpa [#allocation4], 0
    // Predicated region
    $region2: #{tpu_custom_call.1} parent=1 // pred_check
      _
    $region3: #{tpu_custom_call.1} parent=1 // pred_check_branch
      %15 = sbr.rel (0) target = $region5
    $region4: #{tpu_custom_call.1} parent=1 // pred_region
      %s17 = ssub.s32 128, 128
      %18 = vsyncadd [#allocation3], %s17
      %s20 = sshll.u32 [#allocation2], 4
      %s21 = int_to_ptr.vmem [resolvable:$true] %s20
      %23 = dma.hbm_to_vmem [thread:$0]  %s0, 128, %s21, [#allocation3]
    $region5: #{tpu_custom_call.1} parent=1 // pred_fallthru
      _
    // Predicated region
    $region6: #{tpu_custom_call.1} parent=1 // pred_check
      _
    $region7: #{tpu_custom_call.1} parent=1 // pred_check_branch
      %25 = sbr.rel (0) target = $region9
    $region8: #{tpu_custom_call.1} parent=1 // pred_region
      %s27 = ssub.s32 128, 128
      %28 = vsyncadd [#allocation6], %s27
      %s30 = sshll.u32 [#allocation5], 4
      %s31 = int_to_ptr.vmem [resolvable:$true] %s30
      %33 = dma.hbm_to_vmem [thread:$0]  %s1, 128, %s31, [#allocation6]
    $region9: #{tpu_custom_call.1} parent=1 // pred_fallthru
      _
    // Predicated region
    $region10: #{tpu_custom_call.1} parent=1 // pred_check
      _
    $region11: #{tpu_custom_call.1} parent=1 // pred_check_branch
      %35 = sbr.rel (0) target = $region13
    $region12: #{tpu_custom_call.1} parent=1 // pred_region
      %s37 = ssub.s32 128, 128
      %38 = vsyncadd [#allocation6], %s37
      %s40 = sshll.u32 [#allocation7], 4
      %s41 = int_to_ptr.vmem [resolvable:$true] %s40
      %43 = dma.hbm_to_vmem [thread:$0]  %s2, 128, %s41, [#allocation6]
    $region13: #{tpu_custom_call.1} parent=1 // pred_fallthru
      _
    // Predicated region
    $region14: #{tpu_custom_call.1} parent=1 // pred_check
      _
    $region15: #{tpu_custom_call.1} parent=1 // pred_check_branch
      %45 = sbr.rel (0) target = $region17
    $region16: #{tpu_custom_call.1} parent=1 // pred_region
      _
    $region17: #{tpu_custom_call.1} parent=1 // pred_fallthru
      _
    // Predicated region
    $region18: #{tpu_custom_call.1} parent=1 // pred_check
      _
    $region19: #{tpu_custom_call.1} parent=1 // pred_check_branch
      %47 = sbr.rel (0) target = $region21
    $region20: #{tpu_custom_call.1} parent=1 // pred_region
      %s49 = ssub.s32 128, 128
      %50 = vsyncadd [#allocation9], %s49
      %s52 = sshll.u32 [#allocation8], 4
      %s53 = int_to_ptr.vmem [resolvable:$true] %s52
      %55 = dma.hbm_to_vmem [thread:$0]  %s4, 128, %s53, [#allocation9]
    $region21: #{tpu_custom_call.1} parent=1 // pred_fallthru
      _
    // Predicated region
    $region22: #{tpu_custom_call.1} parent=1 // pred_check
      _
    $region23: #{tpu_custom_call.1} parent=1 // pred_check_branch
      %57 = sbr.rel (0) target = $region25
    $region24: #{tpu_custom_call.1} parent=1 // pred_region
      %58 = dma.done [#allocation3], 128
    $region25: #{tpu_custom_call.1} parent=1 // pred_fallthru
      _
    // Predicated region
    $region26: #{tpu_custom_call.1} parent=1 // pred_check
      _
    $region27: #{tpu_custom_call.1} parent=1 // pred_check_branch
      %60 = sbr.rel (0) target = $region29
    $region28: #{tpu_custom_call.1} parent=1 // pred_region
      %61 = dma.done [#allocation6], 128
    $region29: #{tpu_custom_call.1} parent=1 // pred_fallthru
      _
    // Predicated region
    $region30: #{tpu_custom_call.1} parent=1 // pred_check
      _
    $region31: #{tpu_custom_call.1} parent=1 // pred_check_branch
      %63 = sbr.rel (0) target = $region33
    $region32: #{tpu_custom_call.1} parent=1 // pred_region
      %64 = dma.done [#allocation6], 128
    $region33: #{tpu_custom_call.1} parent=1 // pred_fallthru
      _
    // Predicated region
    $region34: #{tpu_custom_call.1} parent=1 // pred_check
      _
    $region35: #{tpu_custom_call.1} parent=1 // pred_check_branch
      %66 = sbr.rel (0) target = $region37
    $region36: #{tpu_custom_call.1} parent=1 // pred_region
      %67 = dma.done [#allocation9], 128
    $region37: #{tpu_custom_call.1} parent=1 // pred_fallthru
      _
    %v68 = vld [vmem:[#allocation2] sm:$0xff]
    %v69 = vld [vmem:[#allocation5] sm:$0xff]
    %v70 = vadd.f32 %v68, %v69
    %v71 = vld [vmem:[#allocation7] sm:$0xff]
    %v72 = vadd.f32 %v70, %v71
    %v73 = vmul.f32 %v72, 0.33333334
    %v74 = vld [vmem:[%s3] sm:$0xff]
    %v75 = vld [vmem:[#allocation8] sm:$0xff]
    %v76 = vsub.f32 1.0, %v75
    %v77 = vmul.f32 %v74, %v75
    %v78 = vmul.f32 %v73, %v76
    %v79 = vmul.f32 %v77, %v75
    %v80 = vadd.f32 %v78, %v79
    %81 = vst [vmem:[#allocation10] sm:$0xff] %v80
    // Predicated region
    $region38: #{tpu_custom_call.1} parent=1 // pred_check
      _
    $region39: #{tpu_custom_call.1} parent=1 // pred_check_branch
      %83 = sbr.rel (0) target = $region41
    $region40: #{tpu_custom_call.1} parent=1 // pred_region
      %s85 = ssub.s32 128, 128
      %86 = vsyncadd [#allocation4], %s85
      %s88 = sshll.u32 [#allocation10], 4
      %s89 = int_to_ptr.vmem [resolvable:$true] %s88
      %91 = dma.vmem_to_hbm [thread:$0]  %s89, 128, %s5, [#allocation4]
    $region41: #{tpu_custom_call.1} parent=1 // pred_fallthru
      _
    // Predicated region
    $region42: #{tpu_custom_call.1} parent=1 // pred_check
      _
    $region43: #{tpu_custom_call.1} parent=1 // pred_check_branch
      %93 = sbr.rel (0) target = $region45
    $region44: #{tpu_custom_call.1} parent=1 // pred_region
      %94 = dma.done [#allocation4], 128
    $region45: #{tpu_custom_call.1} parent=1 // pred_fallthru
      _
    %95 = vsyncpa [#allocation3], 1
    %96 = vsyncpa [#allocation6], 1
    %97 = vsyncpa [#allocation9], 1
    %98 = vsyncpa [#allocation4], 1

</llo_original>
